<compile_context>
chip_gen: v6e
topology: v6e:2x2x1
jax: 0.10.0
libtpu: 0.0.40
codegen_flags: <defaults>
</compile_context>

<pallas_src>
import functools
import math

import jax
import jax.numpy as jnp
from jax.experimental import pallas as pl
from jax.experimental.pallas import tpu as pltpu


# ---------------------------------------------------------------------------
# Pallas kernel: one batch element per grid step.
# Fused (dilated conv1d + bias) for both GLU halves as one matmul,
# speaker-proj softsign, GLU gate, optional residual * sqrt(0.5).
# ---------------------------------------------------------------------------
def _conv1d_glu_kernel(x_ref, se_ref, w_ref, b_ref, wsp_ref, bsp_ref, out_ref,
                       *, K, dilation, pad_left, pad_right, residual,
                       mm_dtype):
    # x_ref   : (C_in, T)            input slice for this batch element
    # se_ref  : (E, T)               speaker embedding (pre-transposed, mm_dtype)
    # w_ref   : (2*C_out, K*C_in)    fused conv weight, col = k*C_in + c_in
    # b_ref   : (2*C_out, 1)         conv bias (f32)
    # wsp_ref : (C_out, E)           speaker-proj weight (mm_dtype)
    # bsp_ref : (C_out, 1)           speaker-proj bias (f32)
    # out_ref : (C_out, T)
    C_in, T = x_ref.shape
    C_out = out_ref.shape[0]
    use_bf16_fast_path = (mm_dtype == jnp.bfloat16)

    x = x_ref[...]                                       # (C_in, T)

    # On-chip zero padding along time (lane axis), per block only — no extra
    # HBM pass and no duplicated full-batch copy in VMEM.
    parts = []
    if pad_left:
        parts.append(jnp.zeros((C_in, pad_left), x.dtype))
    parts.append(x)
    if pad_right:
        parts.append(jnp.zeros((C_in, pad_right), x.dtype))
    x_pad = jnp.concatenate(parts, axis=-1) if len(parts) > 1 else x

    # im2col: stack the K dilated taps along the contraction (sublane) axis.
    x_col = jnp.concatenate(
        [x_pad[:, k * dilation: k * dilation + T] for k in range(K)],
        axis=0).astype(mm_dtype)                         # (K*C_in, T)

    # One MXU matmul produces both GLU halves; f32 accumulation, T on lanes.
    y = jnp.dot(w_ref[...], x_col, preferred_element_type=jnp.float32)
    y = y + b_ref[...]                                   # broadcast (2*C_out,1)
    a = y[:C_out]                                        # (C_out, T)
    g = y[C_out:]                                        # (C_out, T)

    # Speaker projection as a second lane-dense matmul: (C_out,E) @ (E,T).
    sp = jnp.dot(wsp_ref[...], se_ref[...],
                 preferred_element_type=jnp.float32) + bsp_ref[...]
    if use_bf16_fast_path:
        # EUP approximate reciprocal: separate bundle slot next to VPU/MXU work.
        sp = sp * pl.reciprocal(1.0 + jnp.abs(sp), approx=True)
    else:
        sp = sp / (1.0 + jnp.abs(sp))
    a = a + sp

    # GLU gate.  On the bf16 fast path compute sigmoid on bf16 input
    # (v6e/v7x bf16 EUP ~2x); product / residual accumulate in f32.
    if use_bf16_fast_path:
        gate = jax.nn.sigmoid(g.astype(jnp.bfloat16)).astype(jnp.float32)
    else:
        gate = jax.nn.sigmoid(g)
    out = a * gate
    if residual:
        out = (out + x.astype(jnp.float32)) * math.sqrt(0.5)
    out_ref[...] = out.astype(out_ref.dtype)


# ---------------------------------------------------------------------------
# Wrapper: one-time weight prep + pallas_call (no layout passes over x / out).
# ---------------------------------------------------------------------------
def conv1d_glu(x, speaker_embed, conv_weight, conv_bias, sp_weight, sp_bias, *,
               kernel_size, dilation, causal, residual,
               matmul_dtype=jnp.bfloat16, out_dtype=jnp.float32):
    """Fused Conv1dGLU forward (eval mode).

    x            : (B, C_in, T)  (NCT, like the PyTorch module); f32 or bf16
                   (bf16 halves the dominant HBM traffic if the caller allows)
    speaker_embed: (B, T, E)
    conv_weight  : (2*C_out, C_in, K), conv_bias: (2*C_out,)
    sp_weight    : (C_out, E),         sp_bias : (C_out,)
    matmul_dtype : dtype fed to the MXU (bf16 halves DMA bytes and raises MXU
                   rate on all of v5e/v6e/v7x; accumulation stays f32).
    """
    B, C_in, T = x.shape
    two_cout, _, K = conv_weight.shape
    C_out = two_cout // 2
    E = speaker_embed.shape[-1]
    assert K == kernel_size
    if residual:
        assert C_in == C_out, "residual path requires in_channels == out_channels"
    if not causal:
        # PyTorch reference (pad=(K-1)//2*d both sides, slice [:T]) only yields
        # T aligned outputs for odd K; even K would change the output length.
        assert K % 2 == 1, "non-causal path requires an odd kernel_size"

    pad_left = (K - 1) * dilation if causal else (K - 1) // 2 * dilation
    pad_right = (K - 1) * dilation - pad_left

    # One-time (tiny) weight prep: (2*C_out, C_in, K) -> (2*C_out, K*C_in),
    # column index k*C_in + c_in, matching the kernel's im2col row order.
    w2d = jnp.transpose(conv_weight, (0, 2, 1)).reshape(two_cout, K * C_in)
    w2d = w2d.astype(matmul_dtype)
    b2 = conv_bias.reshape(two_cout, 1).astype(jnp.float32)
    wsp = sp_weight.astype(matmul_dtype)                  # (C_out, E)
    bsp = sp_bias.reshape(C_out, 1).astype(jnp.float32)
    # Pre-transpose speaker embed so T sits on lanes inside the kernel (se is
    # much smaller than x, so this wrapper-side layout pass is cheap).
    se = jnp.transpose(speaker_embed, (0, 2, 1)).astype(matmul_dtype)  # (B,E,T)

    kernel = functools.partial(
        _conv1d_glu_kernel, K=K, dilation=dilation, pad_left=pad_left,
        pad_right=pad_right, residual=residual, mm_dtype=matmul_dtype)

    # TODO(synk): training-mode F.dropout (stochastic mask) is not modeled;
    # eval-mode (identity) semantics are implemented.
    return pl.pallas_call(
        kernel,
        out_shape=jax.ShapeDtypeStruct((B, C_out, T), out_dtype),
        grid=(B,),
        in_specs=[
            # Batch dim squeezed out of the kernel view; per-step blocks of x,
            # se and out are double-buffered / pipelined by Pallas.
            pl.BlockSpec((None, C_in, T), lambda b: (b, 0, 0)),
            pl.BlockSpec((None, E, T), lambda b: (b, 0, 0)),
            # Weights / biases: constant block index -> stay resident in VMEM.
            pl.BlockSpec((two_cout, K * C_in), lambda b: (0, 0)),
            pl.BlockSpec((two_cout, 1), lambda b: (0, 0)),
            pl.BlockSpec((C_out, E), lambda b: (0, 0)),
            pl.BlockSpec((C_out, 1), lambda b: (0, 0)),
        ],
        out_specs=pl.BlockSpec((None, C_out, T), lambda b: (b, 0, 0)),
        compiler_params=pltpu.CompilerParams(
            # Batch axis is independent -> shard across v7x TensorCores.
            dimension_semantics=("parallel",),
            vmem_limit_bytes=32 * 1024 * 1024,
        ),
    )(x, se, w2d, b2, wsp, bsp)


# ---------------------------------------------------------------------------
# Pure-JAX reference (mirrors the PyTorch forward, eval mode -> dropout = id)
# ---------------------------------------------------------------------------
def conv1d_glu_reference(x, se, conv_weight, conv_bias, sp_weight, sp_bias, *,
                         kernel_size, dilation, causal, residual):
    K = kernel_size
    pad = (K - 1) * dilation if causal else (K - 1) // 2 * dilation
    y = jax.lax.conv_general_dilated(
        x, conv_weight, window_strides=(1,), padding=[(pad, pad)],
        rhs_dilation=(dilation,), dimension_numbers=("NCH", "OIH", "NCH"))
    y = y + conv_bias[None, :, None]
    y = y[:, :, :x.shape[-1]]
    a, b = jnp.split(y, 2, axis=1)
    sp = jax.nn.soft_sign(se @ sp_weight.T + sp_bias)      # (B, T, C_out)
    a = a + jnp.transpose(sp, (0, 2, 1))
    out = a * jax.nn.sigmoid(b)
    if residual:
        out = (out + x) * math.sqrt(0.5)
    return out


def _init_params(key, in_channels, out_channels, kernel_size,
                 speaker_embed_dim, dropout=0.1, std_mul=4.0):
    # weight_norm is an identity reparameterization at init, so the effective
    # weights equal the normal-initialized ones; biases are zero.
    kw, ks = jax.random.split(key)
    conv_std = math.sqrt(std_mul * (1.0 - dropout) / (kernel_size * in_channels))
    conv_weight = conv_std * jax.random.normal(
        kw, (2 * out_channels, in_channels, kernel_size), jnp.float32)
    conv_bias = jnp.zeros((2 * out_channels,), jnp.float32)
    sp_std = math.sqrt((1.0 - dropout) / speaker_embed_dim)
    sp_weight = sp_std * jax.random.normal(
        ks, (out_channels, speaker_embed_dim), jnp.float32)
    sp_bias = jnp.zeros((out_channels,), jnp.float32)
    return conv_weight, conv_bias, sp_weight, sp_bias


if __name__ == "__main__":
    key = jax.random.PRNGKey(0)
    k_p1, k_p2, k_x1, k_s1, k_x2, k_s2 = jax.random.split(key, 6)

    B, T, E = 2, 32, 16

    # ---- config 1: non-causal, dilation 1, residual (C_in == C_out) ----
    C = 16
    cw, cb, sw, sb = _init_params(k_p1, C, C, 3, E)
    x = jax.random.normal(k_x1, (B, C, T), jnp.float32)
    se = jax.random.normal(k_s1, (B, T, E), jnp.float32)

    ref = conv1d_glu_reference(x, se, cw, cb, sw, sb, kernel_size=3,
                               dilation=1, causal=False, residual=True)

    # Exact f32 path.
    out_f32 = conv1d_glu(x, se, cw, cb, sw, sb, kernel_size=3, dilation=1,
                         causal=False, residual=True,
                         matmul_dtype=jnp.float32)
    out_f32 = jax.block_until_ready(out_f32)
    assert out_f32.shape == (B, C, T)
    assert jnp.allclose(out_f32, ref, atol=1e-4, rtol=1e-4), \
        float(jnp.max(jnp.abs(out_f32 - ref)))

    # bf16-MXU fast path (f32 accumulation) -> relaxed tolerance vs f32 ref.
    out_bf16 = conv1d_glu(x, se, cw, cb, sw, sb, kernel_size=3, dilation=1,
                          causal=False, residual=True,
                          matmul_dtype=jnp.bfloat16)
    out_bf16 = jax.block_until_ready(out_bf16)
    assert jnp.allclose(out_bf16, ref, atol=1e-1, rtol=1e-1), \
        float(jnp.max(jnp.abs(out_bf16 - ref)))

    # ---- config 2: causal, dilation 2, no residual, C_in != C_out ----
    C_in2, C_out2 = 16, 32
    cw2, cb2, sw2, sb2 = _init_params(k_p2, C_in2, C_out2, 3, E)
    x2 = jax.random.normal(k_x2, (B, C_in2, T), jnp.float32)
    se2 = jax.random.normal(k_s2, (B, T, E), jnp.float32)

    ref2 = conv1d_glu_reference(x2, se2, cw2, cb2, sw2, sb2, kernel_size=3,
                                dilation=2, causal=True, residual=False)
    out2 = conv1d_glu(x2, se2, cw2, cb2, sw2, sb2, kernel_size=3, dilation=2,
                      causal=True, residual=False, matmul_dtype=jnp.float32)
    out2 = jax.block_until_ready(out2)
    assert out2.shape == (B, C_out2, T)
    assert jnp.allclose(out2, ref2, atol=1e-4, rtol=1e-4), \
        float(jnp.max(jnp.abs(out2 - ref2)))

    print("KERNEL_OK")
</pallas_src>

<mosaic_0001>
module attributes {stable_mosaic.version = 11 : i64} {
  func.func @_conv1d_glu_kernel(%arg0: i32, %arg1: memref<1x16x32xf32, #tpu.memory_space<vmem>>, %arg2: memref<1x16x32xf32, #tpu.memory_space<vmem>>, %arg3: memref<32x48xf32, #tpu.memory_space<vmem>>, %arg4: memref<32x1xf32, #tpu.memory_space<vmem>>, %arg5: memref<16x16xf32, #tpu.memory_space<vmem>>, %arg6: memref<16x1xf32, #tpu.memory_space<vmem>>, %arg7: memref<1x16x32xf32, #tpu.memory_space<vmem>>) attributes {dimension_semantics = [#tpu.dimension_semantics<parallel>], iteration_bounds = array<i64: 2>, scalar_prefetch = 0 : i64, scratch_operands = 0 : i64, tpu.core_type = #tpu.core_type<tc>, window_params = [{transform_indices = @transform_0, window_bounds = array<i64: 1, 16, 32>}, {transform_indices = @transform_1, window_bounds = array<i64: 1, 16, 32>}, {pipeline_mode = #tpu.pipeline_mode<synchronous>, transform_indices = @transform_2, window_bounds = array<i64: 32, 48>}, {pipeline_mode = #tpu.pipeline_mode<synchronous>, transform_indices = @transform_3, window_bounds = array<i64: 32, 1>}, {pipeline_mode = #tpu.pipeline_mode<synchronous>, transform_indices = @transform_4, window_bounds = array<i64: 16, 16>}, {pipeline_mode = #tpu.pipeline_mode<synchronous>, transform_indices = @transform_5, window_bounds = array<i64: 16, 1>}, {transform_indices = @transform_6, window_bounds = array<i64: 1, 16, 32>}]} {
    %c0 = arith.constant 0 : index
    %c0_0 = arith.constant 0 : index
    %c0_1 = arith.constant 0 : index
    %0 = vector.load %arg1[%c0, %c0_0, %c0_1] : memref<1x16x32xf32, #tpu.memory_space<vmem>>, vector<1x16x32xf32>
    %1 = vector.shape_cast %0 : vector<1x16x32xf32> to vector<16x32xf32>
    %cst = arith.constant 0.000000e+00 : f32
    %2 = vector.broadcast %cst : f32 to vector<16x1xf32>
    %cst_2 = arith.constant 0.000000e+00 : f32
    %3 = vector.broadcast %cst_2 : f32 to vector<16x1xf32>
    %4 = tpu.concatenate %2, %1, %3 in 1 : vector<16x1xf32>, vector<16x32xf32>, vector<16x1xf32> -> vector<16x34xf32>
    %5 = vector.extract_strided_slice %4 {offsets = [0, 0], sizes = [16, 32], strides = [1, 1]} : vector<16x34xf32> to vector<16x32xf32>
    %6 = vector.extract_strided_slice %4 {offsets = [0, 1], sizes = [16, 32], strides = [1, 1]} : vector<16x34xf32> to vector<16x32xf32>
    %7 = vector.extract_strided_slice %4 {offsets = [0, 2], sizes = [16, 32], strides = [1, 1]} : vector<16x34xf32> to vector<16x32xf32>
    %8 = tpu.concatenate %5, %6, %7 in 0 : vector<16x32xf32>, vector<16x32xf32>, vector<16x32xf32> -> vector<48x32xf32>
    %c0_3 = arith.constant 0 : index
    %c0_4 = arith.constant 0 : index
    %9 = vector.load %arg3[%c0_3, %c0_4] : memref<32x48xf32, #tpu.memory_space<vmem>>, vector<32x48xf32>
    %cst_5 = arith.constant dense<0.000000e+00> : vector<32x32xf32>
    %10 = tpu.matmul %9, %8, %cst_5 {dimension_numbers = #tpu.dot_dimension_numbers<[1], [0], [0], [1], [0, 0, 1, 1], [], []>} : vector<32x48xf32>, vector<48x32xf32>, vector<32x32xf32> -> vector<32x32xf32>
    %c0_6 = arith.constant 0 : index
    %c0_7 = arith.constant 0 : index
    %11 = vector.load %arg4[%c0_6, %c0_7] : memref<32x1xf32, #tpu.memory_space<vmem>>, vector<32x1xf32>
    %12 = vector.broadcast %11 : vector<32x1xf32> to vector<32x32xf32>
    %13 = arith.addf %10, %12 : vector<32x32xf32>
    %14 = vector.extract_strided_slice %13 {offsets = [0, 0], sizes = [16, 32], strides = [1, 1]} : vector<32x32xf32> to vector<16x32xf32>
    %15 = vector.extract_strided_slice %13 {offsets = [16, 0], sizes = [16, 32], strides = [1, 1]} : vector<32x32xf32> to vector<16x32xf32>
    %c0_8 = arith.constant 0 : index
    %c0_9 = arith.constant 0 : index
    %16 = vector.load %arg5[%c0_8, %c0_9] : memref<16x16xf32, #tpu.memory_space<vmem>>, vector<16x16xf32>
    %c0_10 = arith.constant 0 : index
    %c0_11 = arith.constant 0 : index
    %c0_12 = arith.constant 0 : index
    %17 = vector.load %arg2[%c0_10, %c0_11, %c0_12] : memref<1x16x32xf32, #tpu.memory_space<vmem>>, vector<1x16x32xf32>
    %18 = vector.shape_cast %17 : vector<1x16x32xf32> to vector<16x32xf32>
    %cst_13 = arith.constant dense<0.000000e+00> : vector<16x32xf32>
    %19 = tpu.matmul %16, %18, %cst_13 {dimension_numbers = #tpu.dot_dimension_numbers<[1], [0], [0], [1], [0, 0, 1, 1], [], []>} : vector<16x16xf32>, vector<16x32xf32>, vector<16x32xf32> -> vector<16x32xf32>
    %c0_14 = arith.constant 0 : index
    %c0_15 = arith.constant 0 : index
    %20 = vector.load %arg6[%c0_14, %c0_15] : memref<16x1xf32, #tpu.memory_space<vmem>>, vector<16x1xf32>
    %21 = vector.broadcast %20 : vector<16x1xf32> to vector<16x32xf32>
    %22 = arith.addf %19, %21 : vector<16x32xf32>
    %23 = math.absf %22 : vector<16x32xf32>
    %cst_16 = arith.constant 1.000000e+00 : f32
    %24 = vector.broadcast %cst_16 : f32 to vector<16x32xf32>
    %25 = arith.addf %24, %23 : vector<16x32xf32>
    %26 = arith.divf %22, %25 : vector<16x32xf32>
    %27 = arith.addf %14, %26 : vector<16x32xf32>
    %28 = arith.negf %15 : vector<16x32xf32>
    %29 = math.exp %28 : vector<16x32xf32>
    %cst_17 = arith.constant 1.000000e+00 : f32
    %30 = vector.broadcast %cst_17 : f32 to vector<16x32xf32>
    %31 = arith.addf %30, %29 : vector<16x32xf32>
    %32 = arith.divf %30, %31 : vector<16x32xf32>
    %33 = arith.mulf %27, %32 : vector<16x32xf32>
    %34 = arith.addf %33, %1 : vector<16x32xf32>
    %cst_18 = arith.constant 0.707106769 : f32
    %35 = vector.broadcast %cst_18 : f32 to vector<16x32xf32>
    %36 = arith.mulf %34, %35 : vector<16x32xf32>
    %c0_19 = arith.constant 0 : index
    %c0_20 = arith.constant 0 : index
    %c0_21 = arith.constant 0 : index
    %37 = vector.load %arg7[%c0_19, %c0_20, %c0_21] : memref<1x16x32xf32, #tpu.memory_space<vmem>>, vector<1x16x32xf32>
    %38 = vector.shape_cast %37 : vector<1x16x32xf32> to vector<16x32xf32>
    %39 = vector.shape_cast %36 : vector<16x32xf32> to vector<1x16x32xf32>
    tpu.vector_store %arg7[%c0_19, %c0_20, %c0_21], %39 {strides = array<i32>} : memref<1x16x32xf32, #tpu.memory_space<vmem>>, vector<1x16x32xf32>,
    return
  }
  func.func @transform_0(%arg0: i32) -> (i32, i32, i32) {
    %c0_i32 = arith.constant 0 : i32
    %c0_i32_0 = arith.constant 0 : i32
    %c0_i32_1 = arith.constant 0 : i32
    return %arg0, %c0_i32, %c0_i32_0 : i32, i32, i32
  }
  func.func @transform_1(%arg0: i32) -> (i32, i32, i32) {
    %c0_i32 = arith.constant 0 : i32
    %c0_i32_0 = arith.constant 0 : i32
    %c0_i32_1 = arith.constant 0 : i32
    return %arg0, %c0_i32, %c0_i32_0 : i32, i32, i32
  }
  func.func @transform_2(%arg0: i32) -> (i32, i32) {
    %c0_i32 = arith.constant 0 : i32
    %c0_i32_0 = arith.constant 0 : i32
    %c0_i32_1 = arith.constant 0 : i32
    return %c0_i32, %c0_i32_0 : i32, i32
  }
  func.func @transform_3(%arg0: i32) -> (i32, i32) {
    %c0_i32 = arith.constant 0 : i32
    %c0_i32_0 = arith.constant 0 : i32
    %c0_i32_1 = arith.constant 0 : i32
    return %c0_i32, %c0_i32_0 : i32, i32
  }
  func.func @transform_4(%arg0: i32) -> (i32, i32) {
    %c0_i32 = arith.constant 0 : i32
    %c0_i32_0 = arith.constant 0 : i32
    %c0_i32_1 = arith.constant 0 : i32
    return %c0_i32, %c0_i32_0 : i32, i32
  }
  func.func @transform_5(%arg0: i32) -> (i32, i32) {
    %c0_i32 = arith.constant 0 : i32
    %c0_i32_0 = arith.constant 0 : i32
    %c0_i32_1 = arith.constant 0 : i32
    return %c0_i32, %c0_i32_0 : i32, i32
  }
  func.func @transform_6(%arg0: i32) -> (i32, i32, i32) {
    %c0_i32 = arith.constant 0 : i32
    %c0_i32_0 = arith.constant 0 : i32
    %c0_i32_1 = arith.constant 0 : i32
    return %arg0, %c0_i32, %c0_i32_0 : i32, i32, i32
  }
}

</mosaic_0001>

<llo_original>
// kernel: tpu_custom_call.1
$region0: #{tpu_custom_call.1}
  #allocation0 [shape = 'u32[]', space=smem, size = 0x4, offset = 0x4, fixed_abs, tag = 'smem constant byte address 0x4 - core index']
  #allocation1 [shape = 'u32[144,128]{1,0:T(1,128)}', space=vmem, size = 0x12000, scoped, tag = 'internal scratch']
  %s0 = inlined_call_operand.vmem [shape: f32[2,16,32], index: 0, kind: input, shape index: {}]
  %s1 = inlined_call_operand.hbm [shape: f32[2,16,32], index: 1, kind: input, shape index: {}]
  %s2 = inlined_call_operand.hbm [shape: f32[32,48], index: 2, kind: input, shape index: {}]
  %s3 = inlined_call_operand.vmem [shape: f32[32,1], index: 3, kind: input, shape index: {}]
  %s4 = inlined_call_operand.vmem [shape: f32[16,16], index: 4, kind: input, shape index: {}]
  %s5 = inlined_call_operand.vmem [shape: f32[16,1], index: 5, kind: input, shape index: {}]
  %s6 = inlined_call_operand.hbm [shape: f32[2,16,32], index: 6, kind: output, shape index: {}]
  %s7 = sld [smem:[#allocation0]]
  $region65: #{tpu_custom_call.1} parent=0
    _
  %s9 = ssub.s32 1, %s7
  %s10 = scalar_select 0, %s9, %s7
  $region1: #{tpu_custom_call.1} parent=0
    #allocation2 [shape = 'u8[16384]{0}', space=vmem, size = 0x4000, scoped, tag = 'input window, operand 1']
    #allocation3 [shape = 's32[2]{0}', space=sflag, size = 0x8, scoped, tag = 'scoped memory for tpu_custom_call.1']
    #allocation4 [shape = 's32[2]{0}', space=sflag, size = 0x8, scoped, tag = 'scoped memory for tpu_custom_call.1']
    #allocation5 [shape = 'u8[16384]{0}', space=vmem, size = 0x4000, scoped, tag = 'input window, operand 2, single buffered']
    #allocation6 [shape = 's32[1]{0}', space=sflag, size = 0x4, scoped, tag = 'scoped memory for tpu_custom_call.1']
    #allocation7 [shape = 'u8[16384]{0}', space=vmem, size = 0x4000, scoped, tag = 'output window, operand 0']
    %11 = vsyncpa [#allocation3], 0
    %s12 = scalar_lea.sflag [#allocation3], 1
    %13 = vsyncpa %s12, 0
    %14 = vsyncpa [#allocation6], 0
    %15 = vsyncpa [#allocation4], 0
    %s16 = scalar_lea.sflag [#allocation4], 1
    %17 = vsyncpa %s16, 0
    loop: start=0, step=1, limit=4
    $region2: #{tpu_custom_call.1} parent=1 // loop_pre_header
      _
    $region3: #{tpu_custom_call.1} parent=1 // loop_header
      %s19 = sphi 0, %s23
      %p20 = scmp.ge.s32.totalorder %s19, 4
      %s29 = sphi 0, %s31
      %s32 = sphi 0, %s29
      %s33 = sphi 0, %s32
      %s49 = sphi 0, %s33
      %s55 = sphi 0, %s57
      %s58 = sphi 0, %s55
      %s59 = sphi 0, %s58
      %s75 = sphi 0, %s59
      %s79 = sphi 0, %s79
      %s81 = sphi 0, %s79
      %s82 = sphi 0, %s81
      %s96 = sphi 0, %s82
      %s100 = sphi 0, %s100
      %s102 = sphi 0, %s100
      %s103 = sphi 0, %s102
      %s117 = sphi 0, %s103
      %s121 = sphi 0, %s121
      %s123 = sphi 0, %s121
      %s124 = sphi 0, %s123
      %s138 = sphi 0, %s124
      %s142 = sphi 0, %s142
      %s144 = sphi 0, %s142
      %s145 = sphi 0, %s144
      %s159 = sphi 0, %s145
      %s165 = sphi 0, %s167
      %s168 = sphi 0, %s165
      %s169 = sphi 0, %s168
      %s185 = sphi 0, %s169
    $region4: #{tpu_custom_call.1} parent=1 // loop_header_branch
      %22 = sbr.rel (%p20) target = $region8
    $region5: #{tpu_custom_call.1} parent=1 // loop_body
      %s24 = ssub.s32 %s19, 1
      %s25 = ssub.s32 %s19, 2
      %s26 = sadd.s32 %s19, 1
      %s27 = ssub.s32 %s19, %s26
      %p28 = scmp.eq.s32.totalorder %s27, 0
      %s30 = sadd.s32 %s29, 1
      %s31 = scalar_select %p28, %s29, %s30
      %p34 = pneg %p28
      %p35 = scmp.eq.s32.totalorder %s19, 1
      %p36 = por %p34, %p35
      %p37 = scmp.ne.s32.totalorder %s29, %s32
      %p38 = scmp.eq.s32.totalorder %s19, 0
      %p39 = por %p37, %p38
      %p40 = scmp.ne.s32.totalorder %s29, %s32
      %p41 = scmp.eq.s32.totalorder %s24, 1
      %p42 = por %p40, %p41
      %p43 = scmp.ne.s32.totalorder %s32, %s33
      %p44 = scmp.eq.s32.totalorder %s24, 0
      %p45 = por %p43, %p44
      %p46 = scmp.ne.s32.totalorder %s32, %s33
      %p47 = scmp.eq.s32.totalorder %s25, 1
      %p48 = por %p46, %p47
      %p50 = scmp.ne.s32.totalorder %s33, %s49
      %p51 = scmp.eq.s32.totalorder %s25, 0
      %p52 = por %p50, %p51
      %s53 = ssub.s32 %s19, %s26
      %p54 = scmp.eq.s32.totalorder %s53, 0
      %s56 = sadd.s32 %s55, 1
      %s57 = scalar_select %p54, %s55, %s56
      %p60 = pneg %p54
      %p61 = scmp.eq.s32.totalorder %s19, 1
      %p62 = por %p60, %p61
      %p63 = scmp.ne.s32.totalorder %s55, %s58
      %p64 = scmp.eq.s32.totalorder %s19, 0
      %p65 = por %p63, %p64
      %p66 = scmp.ne.s32.totalorder %s55, %s58
      %p67 = scmp.eq.s32.totalorder %s24, 1
      %p68 = por %p66, %p67
      %p69 = scmp.ne.s32.totalorder %s58, %s59
      %p70 = scmp.eq.s32.totalorder %s24, 0
      %p71 = por %p69, %p70
      %p72 = scmp.ne.s32.totalorder %s58, %s59
      %p73 = scmp.eq.s32.totalorder %s25, 1
      %p74 = por %p72, %p73
      %p76 = scmp.ne.s32.totalorder %s59, %s75
      %p77 = scmp.eq.s32.totalorder %s25, 0
      %p78 = por %p76, %p77
      %s80 = sadd.s32 %s79, 1
      %p83 = scmp.eq.s32.totalorder %s19, 1
      %p84 = scmp.ne.s32.totalorder %s79, %s81
      %p85 = scmp.eq.s32.totalorder %s19, 0
      %p86 = por %p84, %p85
      %p87 = scmp.ne.s32.totalorder %s79, %s81
      %p88 = scmp.eq.s32.totalorder %s24, 1
      %p89 = por %p87, %p88
      %p90 = scmp.ne.s32.totalorder %s81, %s82
      %p91 = scmp.eq.s32.totalorder %s24, 0
      %p92 = por %p90, %p91
      %p93 = scmp.ne.s32.totalorder %s81, %s82
      %p94 = scmp.eq.s32.totalorder %s25, 1
      %p95 = por %p93, %p94
      %p97 = scmp.ne.s32.totalorder %s82, %s96
      %p98 = scmp.eq.s32.totalorder %s25, 0
      %p99 = por %p97, %p98
      %s101 = sadd.s32 %s100, 1
      %p104 = scmp.eq.s32.totalorder %s19, 1
      %p105 = scmp.ne.s32.totalorder %s100, %s102
      %p106 = scmp.eq.s32.totalorder %s19, 0
      %p107 = por %p105, %p106
      %p108 = scmp.ne.s32.totalorder %s100, %s102
      %p109 = scmp.eq.s32.totalorder %s24, 1
      %p110 = por %p108, %p109
      %p111 = scmp.ne.s32.totalorder %s102, %s103
      %p112 = scmp.eq.s32.totalorder %s24, 0
      %p113 = por %p111, %p112
      %p114 = scmp.ne.s32.totalorder %s102, %s103
      %p115 = scmp.eq.s32.totalorder %s25, 1
      %p116 = por %p114, %p115
      %p118 = scmp.ne.s32.totalorder %s103, %s117
      %p119 = scmp.eq.s32.totalorder %s25, 0
      %p120 = por %p118, %p119
      %s122 = sadd.s32 %s121, 1
      %p125 = scmp.eq.s32.totalorder %s19, 1
      %p126 = scmp.ne.s32.totalorder %s121, %s123
      %p127 = scmp.eq.s32.totalorder %s19, 0
      %p128 = por %p126, %p127
      %p129 = scmp.ne.s32.totalorder %s121, %s123
      %p130 = scmp.eq.s32.totalorder %s24, 1
      %p131 = por %p129, %p130
      %p132 = scmp.ne.s32.totalorder %s123, %s124
      %p133 = scmp.eq.s32.totalorder %s24, 0
      %p134 = por %p132, %p133
      %p135 = scmp.ne.s32.totalorder %s123, %s124
      %p136 = scmp.eq.s32.totalorder %s25, 1
      %p137 = por %p135, %p136
      %p139 = scmp.ne.s32.totalorder %s124, %s138
      %p140 = scmp.eq.s32.totalorder %s25, 0
      %p141 = por %p139, %p140
      %s143 = sadd.s32 %s142, 1
      %p146 = scmp.eq.s32.totalorder %s19, 1
      %p147 = scmp.ne.s32.totalorder %s142, %s144
      %p148 = scmp.eq.s32.totalorder %s19, 0
      %p149 = por %p147, %p148
      %p150 = scmp.ne.s32.totalorder %s142, %s144
      %p151 = scmp.eq.s32.totalorder %s24, 1
      %p152 = por %p150, %p151
      %p153 = scmp.ne.s32.totalorder %s144, %s145
      %p154 = scmp.eq.s32.totalorder %s24, 0
      %p155 = por %p153, %p154
      %p156 = scmp.ne.s32.totalorder %s144, %s145
      %p157 = scmp.eq.s32.totalorder %s25, 1
      %p158 = por %p156, %p157
      %p160 = scmp.ne.s32.totalorder %s145, %s159
      %p161 = scmp.eq.s32.totalorder %s25, 0
      %p162 = por %p160, %p161
      %s163 = ssub.s32 %s19, %s26
      %p164 = scmp.eq.s32.totalorder %s163, 0
      %s166 = sadd.s32 %s165, 1
      %s167 = scalar_select %p164, %s165, %s166
      %p170 = pneg %p164
      %p171 = scmp.eq.s32.totalorder %s19, 1
      %p172 = por %p170, %p171
      %p173 = scmp.ne.s32.totalorder %s165, %s168
      %p174 = scmp.eq.s32.totalorder %s19, 0
      %p175 = por %p173, %p174
      %p176 = scmp.ne.s32.totalorder %s165, %s168
      %p177 = scmp.eq.s32.totalorder %s24, 1
      %p178 = por %p176, %p177
      %p179 = scmp.ne.s32.totalorder %s168, %s169
      %p180 = scmp.eq.s32.totalorder %s24, 0
      %p181 = por %p179, %p180
      %p182 = scmp.ne.s32.totalorder %s168, %s169
      %p183 = scmp.eq.s32.totalorder %s25, 1
      %p184 = por %p182, %p183
      %p186 = scmp.ne.s32.totalorder %s169, %s185
      %p187 = scmp.eq.s32.totalorder %s25, 0
      %p188 = por %p186, %p187
      %p189 = scmp.le.s32.totalorder 1, %s19
      %p190 = scmp.lt.s32.totalorder %s19, 3
      %p191 = pnand %p189, %p190
      %p192 = pneg %p191
      // Predicated region
      $region9: #{tpu_custom_call.1} parent=5 // pred_check
        _
      $region10: #{tpu_custom_call.1} parent=5 // pred_check_branch
        %194 = sbr.rel (%p191) target = $region12
      $region11: #{tpu_custom_call.1} parent=5 // pred_region
        %s195 = ssub.s32 %s19, 1
        // Predicated region
        $region13: #{tpu_custom_call.1} parent=11 // pred_check
          %p196 = pneg %p92
        $region14: #{tpu_custom_call.1} parent=11 // pred_check_branch
          %198 = sbr.rel (%p196) target = $region16
        $region15: #{tpu_custom_call.1} parent=11 // pred_region
          %s200 = ssub.s32 512, 512
          %201 = vsyncadd [#allocation6], %s200
          %s202 = sshll.u32 [#allocation5], 4
          %s203 = int_to_ptr.vmem [resolvable:$true] %s202
          %208 = dma.hbm_to_vmem [thread:$0]  %s2, 512, %s203, [#allocation6], 128, 128, 8
        $region16: #{tpu_custom_call.1} parent=11 // pred_fallthru
          _
        // Predicated region
        $region17: #{tpu_custom_call.1} parent=11 // pred_check
          %p209 = pneg %p113
        $region18: #{tpu_custom_call.1} parent=11 // pred_check_branch
          %211 = sbr.rel (%p209) target = $region20
        $region19: #{tpu_custom_call.1} parent=11 // pred_region
          _
        $region20: #{tpu_custom_call.1} parent=11 // pred_fallthru
          _
        // Predicated region
        $region21: #{tpu_custom_call.1} parent=11 // pred_check
          %p212 = pneg %p134
        $region22: #{tpu_custom_call.1} parent=11 // pred_check_branch
          %214 = sbr.rel (%p212) target = $region24
        $region23: #{tpu_custom_call.1} parent=11 // pred_region
          _
        $region24: #{tpu_custom_call.1} parent=11 // pred_fallthru
          _
        // Predicated region
        $region25: #{tpu_custom_call.1} parent=11 // pred_check
          %p215 = pneg %p155
        $region26: #{tpu_custom_call.1} parent=11 // pred_check_branch
          %217 = sbr.rel (%p215) target = $region28
        $region27: #{tpu_custom_call.1} parent=11 // pred_region
          _
        $region28: #{tpu_custom_call.1} parent=11 // pred_fallthru
          _
      $region12: #{tpu_custom_call.1} parent=5 // pred_fallthru
        _
      %p218 = scmp.lt.s32.totalorder %s19, 2
      // Predicated region
      $region29: #{tpu_custom_call.1} parent=5 // pred_check
        %p219 = pneg %p218
      $region30: #{tpu_custom_call.1} parent=5 // pred_check_branch
        %221 = sbr.rel (%p219) target = $region32
      $region31: #{tpu_custom_call.1} parent=5 // pred_region
        // Predicated region
        $region33: #{tpu_custom_call.1} parent=31 // pred_check
          %p222 = pneg %p39
        $region34: #{tpu_custom_call.1} parent=31 // pred_check_branch
          %224 = sbr.rel (%p222) target = $region36
        $region35: #{tpu_custom_call.1} parent=31 // pred_region
          %p225 = scmp.lt.s32.totalorder %s19, 1
          %s226 = scalar_select %p225, %s19, 1
          %s227 = smul.addr %s226, 2
          %s228 = smul.addr %s227, 8
          %s229 = scalar_lea.vmem %s0, %s228
        $region36: #{tpu_custom_call.1} parent=31 // pred_fallthru
          _
        // Predicated region
        $region37: #{tpu_custom_call.1} parent=31 // pred_check
          %p230 = pneg %p65
        $region38: #{tpu_custom_call.1} parent=31 // pred_check_branch
          %232 = sbr.rel (%p230) target = $region40
        $region39: #{tpu_custom_call.1} parent=31 // pred_region
          %s233 = sand.u32 %s55, 1
          %s234 = scalar_lea.sflag [#allocation3], %s233
          %s235 = sand.u32 %s55, 1
          %s236 = smul.addr %s235, 16
          %s237 = scalar_lea.vmem [#allocation2], %s236
          %s239 = ssub.s32 256, 256
          %240 = vsyncadd %s234, %s239
          %s241 = smul.addr %s19, 2
          %s242 = smul.addr %s241, 128
          %s243 = scalar_lea.hbm %s1, %s242
          %s244 = sshll.u32 %s237, 4
          %s245 = int_to_ptr.vmem [resolvable:$true] %s244
          %250 = dma.hbm_to_vmem [thread:$0]  %s243, 256, %s245, %s234, 128, 128, 8
        $region40: #{tpu_custom_call.1} parent=31 // pred_fallthru
          _
      $region32: #{tpu_custom_call.1} parent=5 // pred_fallthru
        _
      %p251 = scmp.le.s32.totalorder 1, %s19
      %p252 = scmp.lt.s32.totalorder %s19, 3
      %p253 = pnand %p251, %p252
      %p254 = pneg %p253
      // Predicated region
      $region41: #{tpu_custom_call.1} parent=5 // pred_check
        _
      $region42: #{tpu_custom_call.1} parent=5 // pred_check_branch
        %256 = sbr.rel (%p253) target = $region44
      $region43: #{tpu_custom_call.1} parent=5 // pred_region
        %s257 = ssub.s32 %s19, 1
        %s258 = sand.u32 %s58, 1
        %s259 = scalar_lea.sflag [#allocation3], %s258
        %s260 = sand.u32 %s58, 1
        %s261 = smul.addr %s260, 16
        %s262 = scalar_lea.vmem [#allocation2], %s261
        // Predicated region
        $region45: #{tpu_custom_call.1} parent=43 // pred_check
          %p263 = pneg %p71
        $region46: #{tpu_custom_call.1} parent=43 // pred_check_branch
          %265 = sbr.rel (%p263) target = $region48
        $region47: #{tpu_custom_call.1} parent=43 // pred_region
          %266 = dma.done %s259, 256
        $region48: #{tpu_custom_call.1} parent=43 // pred_fallthru
          _
        // Predicated region
        $region49: #{tpu_custom_call.1} parent=43 // pred_check
          %p267 = pneg %p92
        $region50: #{tpu_custom_call.1} parent=43 // pred_check_branch
          %269 = sbr.rel (%p267) target = $region52
        $region51: #{tpu_custom_call.1} parent=43 // pred_region
          %270 = dma.done [#allocation6], 512
        $region52: #{tpu_custom_call.1} parent=43 // pred_fallthru
          _
        %p271 = scmp.lt.s32.totalorder %s24, 1
        %s272 = scalar_select %p271, %s24, 1
        %s273 = smul.addr %s272, 2
        %s274 = smul.addr %s273, 8
        %s275 = scalar_lea.vmem %s0, %s274
        %p276 = pneg %p45
        %p277 = pneg %p42
        %s278 = sand.u32 %s58, 1
        %s279 = scalar_lea.sflag [#allocation3], %s278
        %s280 = sand.u32 %s58, 1
        %s281 = smul.addr %s280, 16
        %s282 = scalar_lea.vmem [#allocation2], %s281
        %p283 = pneg %p71
        %p284 = pneg %p68
        %p285 = pneg %p92
        %p286 = pneg %p89
        %p287 = pneg %p113
        %p288 = pneg %p110
        %p289 = pneg %p134
        %p290 = pneg %p131
        %p291 = pneg %p155
        %p292 = pneg %p152
        %p293 = pneg %p181
        %p294 = pneg %p178
        %s295 = sand.u32 %s168, 1
        %s296 = scalar_lea.sflag [#allocation4], %s295
        %s297 = sand.u32 %s168, 1
        %s298 = smul.addr %s297, 16
        %s299 = scalar_lea.vmem [#allocation7], %s298
        %p300 = scmp.lt.s32.totalorder %s24, 1
        %s301 = scalar_select %p300, %s24, 1
        %s302 = smul.addr %s301, 2
        %s303 = smul.addr %s302, 8
        %s304 = scalar_lea.vmem %s0, %s303
        %v305 = vld [vmem:[%s304] sm:$0xff]
        %v306 = vld [vmem:[%s304 + $0x8] sm:$0xff]
        %309 = vrot.lane.b32.xlu0 %v305, 1
        %v310 = vpop.permute.xlu0 %309
        %311 = vrot.lane.b32.xlu0 %v306, 1
        %v312 = vpop.permute.xlu0 %311
        %vm315 = vcmask 7168
        %v316 = vsel %vm315, 0.0, %v310
        %v317 = vsel %vm315, 0.0, %v312
        %vm318 = vcmask 269312
        %v319 = vsel %vm318, %v316, 0.0
        %v320 = vsel %vm318, %v317, 0.0
        %323 = vrot.lane.b32.xlu0 %v319, 127
        %v324 = vpop.permute.xlu0 %323
        %325 = vrot.lane.b32.xlu0 %v320, 127
        %v326 = vpop.permute.xlu0 %325
        %329 = vrot.lane.b32.xlu0 %v319, 126
        %v330 = vpop.permute.xlu0 %329
        %331 = vrot.lane.b32.xlu0 %v320, 126
        %v332 = vpop.permute.xlu0 %331
        %v335 = vld [vmem:[#allocation5] sm:$0xff]
        %v336 = vld [vmem:[#allocation5 + $0x8] sm:$0xff]
        %v337 = vld [vmem:[#allocation5 + $0x10] sm:$0xff]
        %v338 = vld [vmem:[#allocation5 + $0x18] sm:$0xff]
        %v339 = vld [vmem:[%s3] sm:$0xff]
        %v340 = vld [vmem:[%s3 + $0x8] sm:$0xff]
        %v341 = vld [vmem:[%s3 + $0x10] sm:$0xff]
        %v342 = vld [vmem:[%s3 + $0x18] sm:$0xff]
        %344 = vset.pattern.permute.xlu0 0
        %345 = vperm.xlu0 %344, %v339
        %v346 = vpop.permute.xlu0 %345
        %349 = vset.pattern.permute.xlu0 0
        %350 = vperm.xlu0 %349, %v340
        %v351 = vpop.permute.xlu0 %350
        %354 = vset.pattern.permute.xlu0 0
        %355 = vperm.xlu0 %354, %v341
        %v356 = vpop.permute.xlu0 %355
        %359 = vset.pattern.permute.xlu0 0
        %360 = vperm.xlu0 %359, %v342
        %v361 = vpop.permute.xlu0 %360
        %vm363 = vcmask 392192
        %v365 = vsel %vm363, %v335, 0
        %v368 = vsel %vm363, %v336, 0
        %v371 = vsel %vm363, %v337, 0
        %v374 = vsel %vm363, %v338, 0
        %376 = vmatprep.subr.mxu0 0.0
        %377 = vmatpush1.msra.mxu0 0.0
        %378 = vmatprep.subr.mxu0 0.0
        %379 = vmatpush1.msra.mxu0 0.0
        %380 = vmatprep.subr.mxu0 0.0
        %381 = vmatpush1.msra.mxu0 0.0
        %382 = vmatprep.subr.mxu0 0.0
        %383 = vmatpush1.msra.mxu0 0.0
        %384 = vmatprep.subr.mxu0 0.0
        %385 = vmatpush1.msra.mxu0 0.0
        %386 = vmatprep.subr.mxu0 0.0
        %387 = vmatpush1.msra.mxu0 0.0
        %388 = vmatprep.subr.mxu0 0.0
        %389 = vmatpush1.msra.mxu0 0.0
        %390 = vmatprep.subr.mxu0 0.0
        %391 = vmatpush1.msra.mxu0 0.0
        %392 = vmatprep.subr.mxu0 0.0
        %393 = vmatpush1.msra.mxu0 0.0
        %394 = vmatprep.subr.mxu0 0.0
        %395 = vmatpush1.msra.mxu0 0.0
        %396 = vmatprep.subr.mxu0 0.0
        %397 = vmatpush1.msra.mxu0 %v332
        %398 = vmatprep.subr.mxu0 0.0
        %399 = vmatpush1.msra.mxu0 %v330
        %400 = vmatprep.subr.mxu0 0.0
        %401 = vmatpush1.msra.mxu0 %v326
        %402 = vmatprep.subr.mxu0 0.0
        %403 = vmatpush1.msra.mxu0 %v324
        %404 = vmatprep.subr.mxu0 0.0
        %405 = vmatpush1.msra.mxu0 %v320
        %406 = vmatprep.subr.mxu0 0.0
        %407 = vmatpush1.msra.mxu0 %v319
        %408 = vmatprep.subr.mxu0 0.0
        %409 = vmatpush2.msra.mxu0 0.0
        %410 = vmatprep.subr.mxu0 0.0
        %411 = vmatpush2.msra.mxu0 0.0
        %412 = vmatprep.subr.mxu0 0.0
        %413 = vmatpush2.msra.mxu0 0.0
        %414 = vmatprep.subr.mxu0 0.0
        %415 = vmatpush2.msra.mxu0 0.0
        %416 = vmatprep.subr.mxu0 0.0
        %417 = vmatpush2.msra.mxu0 0.0
        %418 = vmatprep.subr.mxu0 0.0
        %419 = vmatpush2.msra.mxu0 0.0
        %420 = vmatprep.subr.mxu0 0.0
        %421 = vmatpush2.msra.mxu0 0.0
        %422 = vmatprep.subr.mxu0 0.0
        %423 = vmatpush2.msra.mxu0 0.0
        %424 = vmatprep.subr.mxu0 0.0
        %425 = vmatpush2.msra.mxu0 0.0
        %426 = vmatprep.subr.mxu0 0.0
        %427 = vmatpush2.msra.mxu0 0.0
        %428 = vmatprep.subr.mxu0 0.0
        %429 = vmatpush2.msra.mxu0 0.0
        %430 = vmatprep.subr.mxu0 0.0
        %431 = vmatpush2.msra.mxu0 0.0
        %432 = vmatprep.subr.mxu0 0.0
        %433 = vmatpush2.msra.mxu0 0.0
        %434 = vmatprep.subr.mxu0 0.0
        %435 = vmatpush2.msra.mxu0 0.0
        %436 = vmatprep.subr.mxu0 0.0
        %437 = vmatpush2.msra.mxu0 0.0
        %438 = vmatprep.subr.mxu0 0.0
        %439 = vmatpush2.msra.mxu0 0.0
        %440 = vmatprep.mubr.f32.mxu0 0.0
        %441 = vmatmul.mubr.f32.gmra.mxu0 %v365
        %v442 = vpop.f32.mrf.mxu0
        %v443 = vadd.f32 %v346, %v442
        %v444 = vpop.f32.mrf.mxu0
        %445 = vmatprep.mubr.f32.mxu0 0.0
        %446 = vmatmul.mubr.f32.gmra.mxu0 %v368
        %v447 = vpop.f32.mrf.mxu0
        %v448 = vadd.f32 %v351, %v447
        %v449 = vpop.f32.mrf.mxu0
        %450 = vmatprep.mubr.f32.mxu0 0.0
        %451 = vmatmul.mubr.f32.gmra.mxu0 %v371
        %v452 = vpop.f32.mrf.mxu0
        %v453 = vadd.f32 %v356, %v452
        %v454 = vpop.f32.mrf.mxu0
        %455 = vmatprep.mubr.f32.mxu0 0.0
        %456 = vmatmul.mubr.f32.gmra.mxu0 %v374
        %v457 = vpop.f32.mrf.mxu0
        %v458 = vadd.f32 %v361, %v457
        %v459 = vpop.f32.mrf.mxu0
        %460 = vdwg.mxu0
        %v461 = vld [vmem:[%s4] sm:$0xff]
        %v462 = vld [vmem:[%s4 + $0x8] sm:$0xff]
        %v463 = vld [vmem:[%s262] sm:$0xff]
        %v464 = vld [vmem:[%s262 + $0x8] sm:$0xff]
        %v465 = vld [vmem:[%s5] sm:$0xff]
        %v466 = vld [vmem:[%s5 + $0x8] sm:$0xff]
        %468 = vset.pattern.permute.xlu0 0
        %469 = vperm.xlu0 %468, %v465
        %v470 = vpop.permute.xlu0 %469
        %473 = vset.pattern.permute.xlu0 0
        %474 = vperm.xlu0 %473, %v466
        %v475 = vpop.permute.xlu0 %474
        %vm477 = vcmask 130048
        %v479 = vsel %vm477, %v461, 0
        %v482 = vsel %vm477, %v462, 0
        %484 = vmatprep.subr.mxu0 0.0
        %485 = vmatpush1.msra.mxu0 0.0
        %486 = vmatprep.subr.mxu0 0.0
        %487 = vmatpush1.msra.mxu0 0.0
        %488 = vmatprep.subr.mxu0 0.0
        %489 = vmatpush1.msra.mxu0 0.0
        %490 = vmatprep.subr.mxu0 0.0
        %491 = vmatpush1.msra.mxu0 0.0
        %492 = vmatprep.subr.mxu0 0.0
        %493 = vmatpush1.msra.mxu0 0.0
        %494 = vmatprep.subr.mxu0 0.0
        %495 = vmatpush1.msra.mxu0 0.0
        %496 = vmatprep.subr.mxu0 0.0
        %497 = vmatpush1.msra.mxu0 0.0
        %498 = vmatprep.subr.mxu0 0.0
        %499 = vmatpush1.msra.mxu0 0.0
        %500 = vmatprep.subr.mxu0 0.0
        %501 = vmatpush1.msra.mxu0 0.0
        %502 = vmatprep.subr.mxu0 0.0
        %503 = vmatpush1.msra.mxu0 0.0
        %504 = vmatprep.subr.mxu0 0.0
        %505 = vmatpush1.msra.mxu0 0.0
        %506 = vmatprep.subr.mxu0 0.0
        %507 = vmatpush1.msra.mxu0 0.0
        %508 = vmatprep.subr.mxu0 0.0
        %509 = vmatpush1.msra.mxu0 0.0
        %510 = vmatprep.subr.mxu0 0.0
        %511 = vmatpush1.msra.mxu0 0.0
        %512 = vmatprep.subr.mxu0 0.0
        %513 = vmatpush1.msra.mxu0 %v464
        %514 = vmatprep.subr.mxu0 0.0
        %515 = vmatpush1.msra.mxu0 %v463
        %516 = vmatprep.subr.mxu0 0.0
        %517 = vmatpush2.msra.mxu0 0.0
        %518 = vmatprep.subr.mxu0 0.0
        %519 = vmatpush2.msra.mxu0 0.0
        %520 = vmatprep.subr.mxu0 0.0
        %521 = vmatpush2.msra.mxu0 0.0
        %522 = vmatprep.subr.mxu0 0.0
        %523 = vmatpush2.msra.mxu0 0.0
        %524 = vmatprep.subr.mxu0 0.0
        %525 = vmatpush2.msra.mxu0 0.0
        %526 = vmatprep.subr.mxu0 0.0
        %527 = vmatpush2.msra.mxu0 0.0
        %528 = vmatprep.subr.mxu0 0.0
        %529 = vmatpush2.msra.mxu0 0.0
        %530 = vmatprep.subr.mxu0 0.0
        %531 = vmatpush2.msra.mxu0 0.0
        %532 = vmatprep.subr.mxu0 0.0
        %533 = vmatpush2.msra.mxu0 0.0
        %534 = vmatprep.subr.mxu0 0.0
        %535 = vmatpush2.msra.mxu0 0.0
        %536 = vmatprep.subr.mxu0 0.0
        %537 = vmatpush2.msra.mxu0 0.0
        %538 = vmatprep.subr.mxu0 0.0
        %539 = vmatpush2.msra.mxu0 0.0
        %540 = vmatprep.subr.mxu0 0.0
        %541 = vmatpush2.msra.mxu0 0.0
        %542 = vmatprep.subr.mxu0 0.0
        %543 = vmatpush2.msra.mxu0 0.0
        %544 = vmatprep.subr.mxu0 0.0
        %545 = vmatpush2.msra.mxu0 0.0
        %546 = vmatprep.subr.mxu0 0.0
        %547 = vmatpush2.msra.mxu0 0.0
        %548 = vmatprep.mubr.f32.mxu0 0.0
        %549 = vmatmul.mubr.f32.gmra.mxu0 %v479
        %v550 = vpop.f32.mrf.mxu0
        %v551 = vadd.f32 %v470, %v550
        %v552 = vpop.f32.mrf.mxu0
        %553 = vmatprep.mubr.f32.mxu0 0.0
        %554 = vmatmul.mubr.f32.gmra.mxu0 %v482
        %v555 = vpop.f32.mrf.mxu0
        %v556 = vadd.f32 %v475, %v555
        %v557 = vpop.f32.mrf.mxu0
        %558 = vdwg.mxu0
        %v559 = vand.u32 2147483647, %v551
        %v560 = vand.u32 2147483647, %v556
        %v561 = vadd.f32 %v559, 1.0
        %v562 = vadd.f32 %v560, 1.0
        %v563 = vrcp.pop %v561
        %v564 = vmul.f32 %v551, %v563
        %v565 = vrcp.pop %v562
        %v566 = vmul.f32 %v556, %v565
        %v567 = vadd.f32 %v443, %v564
        %v568 = vadd.f32 %v448, %v566
        %v569 = vxor.u32 %v453, 2147483648
        %v570 = vxor.u32 %v458, 2147483648
        %v571 = vmul.f32 %v569, 1.442695
        %v572 = vpow.pop %v571
        %v573 = vmul.f32 %v570, 1.442695
        %v574 = vpow.pop %v573
        %v575 = vadd.f32 %v572, 1.0
        %v576 = vadd.f32 %v574, 1.0
        %v577 = vrcp.pop %v575
        %v578 = vmul.f32 1.0, %v577
        %v579 = vrcp.pop %v576
        %v580 = vmul.f32 1.0, %v579
        %v581 = vmul.f32 %v567, %v578
        %v582 = vmul.f32 %v568, %v580
        %v583 = vadd.f32 %v581, %v305
        %v584 = vadd.f32 %v582, %v306
        %v585 = vmul.f32 %v583, 0.70710677
        %v586 = vmul.f32 %v584, 0.70710677
        %vm587 = vcmask 261120
        %588 = vst.msk [vmem:[%s299] sm:$0xff] %vm587, %v585
        %589 = vst.msk [vmem:[%s299 + $0x8] sm:$0xff] %vm587, %v586
        %s590 = sand.u32 %s168, 1
        %s591 = scalar_lea.sflag [#allocation4], %s590
        %s592 = sand.u32 %s168, 1
        %s593 = smul.addr %s592, 16
        %s594 = scalar_lea.vmem [#allocation7], %s593
        // Predicated region
        $region53: #{tpu_custom_call.1} parent=43 // pred_check
          %p595 = pneg %p178
        $region54: #{tpu_custom_call.1} parent=43 // pred_check_branch
          %597 = sbr.rel (%p595) target = $region56
        $region55: #{tpu_custom_call.1} parent=43 // pred_region
          %s599 = ssub.s32 256, 256
          %600 = vsyncadd %s591, %s599
          %s601 = smul.addr %s24, 2
          %s602 = smul.addr %s601, 128
          %s603 = scalar_lea.hbm %s6, %s602
          %s604 = sshll.u32 %s594, 4
          %s605 = int_to_ptr.vmem [resolvable:$true] %s604
          %610 = dma.vmem_to_hbm [thread:$0]  %s605, 256, %s603, %s591, 128, 128, 8
        $region56: #{tpu_custom_call.1} parent=43 // pred_fallthru
          _
      $region44: #{tpu_custom_call.1} parent=5 // pred_fallthru
        _
      %p611 = scmp.le.s32.totalorder 2, %s19
      // Predicated region
      $region57: #{tpu_custom_call.1} parent=5 // pred_check
        %p612 = pneg %p611
      $region58: #{tpu_custom_call.1} parent=5 // pred_check_branch
        %614 = sbr.rel (%p612) target = $region60
      $region59: #{tpu_custom_call.1} parent=5 // pred_region
        %s615 = ssub.s32 %s19, 2
        // Predicated region
        $region61: #{tpu_custom_call.1} parent=59 // pred_check
          %p616 = pneg %p184
        $region62: #{tpu_custom_call.1} parent=59 // pred_check_branch
          %618 = sbr.rel (%p616) target = $region64
        $region63: #{tpu_custom_call.1} parent=59 // pred_region
          %s619 = sand.u32 %s169, 1
          %s620 = scalar_lea.sflag [#allocation4], %s619
          %s621 = sand.u32 %s169, 1
          %s622 = smul.addr %s621, 16
          %s623 = scalar_lea.vmem [#allocation7], %s622
          %624 = dma.done %s620, 256
        $region64: #{tpu_custom_call.1} parent=59 // pred_fallthru
          _
      $region60: #{tpu_custom_call.1} parent=5 // pred_fallthru
        _
    $region6: #{tpu_custom_call.1} parent=1 // loop_footer
      %s23 = sadd.s32 1, %s19
    $region7: #{tpu_custom_call.1} parent=1 // loop_footer_branch
      %18 = sbr.rel target = $region3
    $region8: #{tpu_custom_call.1} parent=1 // loop_exit
      _
    %625 = vsyncpa [#allocation3], 1
    %s626 = scalar_lea.sflag [#allocation3], 1
    %627 = vsyncpa %s626, 1
    %628 = vsyncpa [#allocation6], 1
    %629 = vsyncpa [#allocation4], 1
    %s630 = scalar_lea.sflag [#allocation4], 1
    %631 = vsyncpa %s630, 1

</llo_original>
